<compile_context>
chip_gen: v7x
topology: tpu7x:2x2x1
jax: 0.10.0
libtpu: 0.0.40
codegen_flags: <defaults>
</compile_context>

<pallas_src>
import functools

import jax
import jax.numpy as jnp
from jax.experimental import pallas as pl
from jax.experimental.pallas import tpu as pltpu


def _context_gating_kernel(x_ref, w_ref, b_ref, o_ref):
    # x_ref : (1, C, thw)  one batch's channel-major slab, spatial on lanes
    # w_ref : (C, C)       PyTorch Linear weight (out_dim, in_dim), used as-is
    # b_ref : (C, 1)       bias, broadcast over lanes
    # o_ref : (1, C, thw)
    x = x_ref[0]                                                     # (C, thw)
    lin = jnp.dot(w_ref[...], x, preferred_element_type=jnp.float32)
    lin = lin + b_ref[...]
    # sigmoid via EUP-friendly tanh: no VPU divide, no inf intermediate.
    sig = 0.5 * (jnp.tanh(0.5 * lin) + 1.0)
    o_ref[0] = (x.astype(jnp.float32) * sig).astype(o_ref.dtype)


@functools.partial(jax.jit, static_argnames=("tile_hw",))
def context_gating(x_nchw, weight, bias, *, tile_hw=512):
    """x_nchw: (B, C, H, W); weight: (C, C) PyTorch Linear weight; bias: (C,)."""
    B, C, H, W = x_nchw.shape
    HW = H * W

    # Keep NCHW; flattening the spatial dims is contiguous and free.
    x3d = x_nchw.reshape(B, C, HW)
    b2 = bias.reshape(C, 1)

    # Lane tile: multiple of 128 (default 512) or the full spatial extent.
    tile_hw = max(128, (tile_hw // 128) * 128)
    thw = HW if HW <= tile_hw else tile_hw
    grid = (B, pl.cdiv(HW, thw))

    # Weight stays resident across the grid.  Single-buffer it when a
    # double-buffered (C, C) weight would strain the v7x 64 MiB VMEM budget.
    w_spec_kwargs = {}
    if 2 * C * C * jnp.dtype(weight.dtype).itemsize > (16 << 20):
        w_spec_kwargs["pipeline_mode"] = pl.Buffered(1)
    w_spec = pl.BlockSpec((C, C), lambda b, j: (0, 0), **w_spec_kwargs)

    out3d = pl.pallas_call(
        _context_gating_kernel,
        out_shape=jax.ShapeDtypeStruct((B, C, HW), x3d.dtype),
        grid_spec=pltpu.PrefetchScalarGridSpec(
            num_scalar_prefetch=0,
            grid=grid,
            in_specs=[
                pl.BlockSpec((1, C, thw), lambda b, j: (b, 0, j)),   # x slab
                w_spec,                                              # W (resident)
                pl.BlockSpec((C, 1), lambda b, j: (0, 0)),           # bias
            ],
            out_specs=pl.BlockSpec((1, C, thw), lambda b, j: (b, 0, j)),
        ),
        compiler_params=pltpu.CompilerParams(
            dimension_semantics=("parallel", "parallel"),
            vmem_limit_bytes=64 << 20,   # v5e scoped default is only 16 MiB
        ),
    )(x3d, weight, b2)

    return out3d.reshape(B, C, H, W)


def _reference(x_nchw, weight, bias):
    # Pure-JAX reference mirroring the PyTorch forward.
    xp = jnp.transpose(x_nchw, (0, 2, 3, 1))                 # NHWC
    lin = xp @ weight.T + bias                               # Linear over C
    lin = jnp.transpose(lin, (0, 3, 1, 2))                   # NCHW
    return x_nchw * jax.nn.sigmoid(lin)


if __name__ == "__main__":
    B, C, H, W = 2, 4, 16, 16
    key = jax.random.PRNGKey(0)
    kx, kw, kb = jax.random.split(key, 3)

    x = jax.random.normal(kx, (B, C, H, W), dtype=jnp.float32)

    # Deterministic init matching nn.Linear defaults: U(-1/sqrt(in_dim), 1/sqrt(in_dim))
    bound = 1.0 / (C ** 0.5)
    weight = jax.random.uniform(kw, (C, C), minval=-bound, maxval=bound,
                                dtype=jnp.float32)
    bias = jax.random.uniform(kb, (C,), minval=-bound, maxval=bound,
                              dtype=jnp.float32)

    out = context_gating(x, weight, bias)
    out = jax.block_until_ready(out)

    ref = _reference(x, weight, bias)
    assert out.shape == (B, C, H, W)
    assert jnp.allclose(out, ref, atol=1e-5, rtol=1e-5)
    print("KERNEL_OK")
</pallas_src>

<mosaic_0001>
module attributes {stable_mosaic.version = 11 : i64} {
  func.func @_context_gating_kernel(%arg0: i32, %arg1: i32, %arg2: memref<1x4x256xf32, #tpu.memory_space<vmem>>, %arg3: memref<4x4xf32, #tpu.memory_space<vmem>>, %arg4: memref<4x1xf32, #tpu.memory_space<vmem>>, %arg5: memref<1x4x256xf32, #tpu.memory_space<vmem>>) attributes {dimension_semantics = [#tpu.dimension_semantics<parallel>, #tpu.dimension_semantics<parallel>], iteration_bounds = array<i64: 2, 1>, scalar_prefetch = 0 : i64, scratch_operands = 0 : i64, tpu.core_type = #tpu.core_type<tc>, window_params = [{transform_indices = @transform_0, window_bounds = array<i64: 1, 4, 256>}, {pipeline_mode = #tpu.pipeline_mode<synchronous>, transform_indices = @transform_1, window_bounds = array<i64: 4, 4>}, {pipeline_mode = #tpu.pipeline_mode<synchronous>, transform_indices = @transform_2, window_bounds = array<i64: 4, 1>}, {transform_indices = @transform_3, window_bounds = array<i64: 1, 4, 256>}]} {
    %c0 = arith.constant 0 : index
    %c0_0 = arith.constant 0 : index
    %c0_1 = arith.constant 0 : index
    %0 = vector.load %arg2[%c0, %c0_0, %c0_1] : memref<1x4x256xf32, #tpu.memory_space<vmem>>, vector<1x4x256xf32>
    %1 = vector.shape_cast %0 : vector<1x4x256xf32> to vector<4x256xf32>
    %c0_2 = arith.constant 0 : index
    %c0_3 = arith.constant 0 : index
    %2 = vector.load %arg3[%c0_2, %c0_3] : memref<4x4xf32, #tpu.memory_space<vmem>>, vector<4x4xf32>
    %cst = arith.constant dense<0.000000e+00> : vector<4x256xf32>
    %3 = tpu.matmul %2, %1, %cst {dimension_numbers = #tpu.dot_dimension_numbers<[1], [0], [0], [1], [0, 0, 1, 1], [], []>} : vector<4x4xf32>, vector<4x256xf32>, vector<4x256xf32> -> vector<4x256xf32>
    %c0_4 = arith.constant 0 : index
    %c0_5 = arith.constant 0 : index
    %4 = vector.load %arg4[%c0_4, %c0_5] : memref<4x1xf32, #tpu.memory_space<vmem>>, vector<4x1xf32>
    %5 = vector.broadcast %4 : vector<4x1xf32> to vector<4x256xf32>
    %6 = arith.addf %3, %5 : vector<4x256xf32>
    %cst_6 = arith.constant 5.000000e-01 : f32
    %7 = vector.broadcast %cst_6 : f32 to vector<4x256xf32>
    %8 = arith.mulf %7, %6 : vector<4x256xf32>
    %9 = math.tanh %8 : vector<4x256xf32>
    %cst_7 = arith.constant 1.000000e+00 : f32
    %10 = vector.broadcast %cst_7 : f32 to vector<4x256xf32>
    %11 = arith.addf %9, %10 : vector<4x256xf32>
    %cst_8 = arith.constant 5.000000e-01 : f32
    %12 = vector.broadcast %cst_8 : f32 to vector<4x256xf32>
    %13 = arith.mulf %12, %11 : vector<4x256xf32>
    %14 = arith.mulf %1, %13 : vector<4x256xf32>
    %c0_9 = arith.constant 0 : index
    %c0_10 = arith.constant 0 : index
    %c0_11 = arith.constant 0 : index
    %15 = vector.load %arg5[%c0_9, %c0_10, %c0_11] : memref<1x4x256xf32, #tpu.memory_space<vmem>>, vector<1x4x256xf32>
    %16 = vector.shape_cast %15 : vector<1x4x256xf32> to vector<4x256xf32>
    %17 = vector.shape_cast %14 : vector<4x256xf32> to vector<1x4x256xf32>
    tpu.vector_store %arg5[%c0_9, %c0_10, %c0_11], %17 {strides = array<i32>} : memref<1x4x256xf32, #tpu.memory_space<vmem>>, vector<1x4x256xf32>,
    return
  }
  func.func @transform_0(%arg0: i32, %arg1: i32) -> (i32, i32, i32) {
    %c0_i32 = arith.constant 0 : i32
    %c0_i32_0 = arith.constant 0 : i32
    return %arg0, %c0_i32, %arg1 : i32, i32, i32
  }
  func.func @transform_1(%arg0: i32, %arg1: i32) -> (i32, i32) {
    %c0_i32 = arith.constant 0 : i32
    %c0_i32_0 = arith.constant 0 : i32
    %c0_i32_1 = arith.constant 0 : i32
    return %c0_i32, %c0_i32_0 : i32, i32
  }
  func.func @transform_2(%arg0: i32, %arg1: i32) -> (i32, i32) {
    %c0_i32 = arith.constant 0 : i32
    %c0_i32_0 = arith.constant 0 : i32
    %c0_i32_1 = arith.constant 0 : i32
    return %c0_i32, %c0_i32_0 : i32, i32
  }
  func.func @transform_3(%arg0: i32, %arg1: i32) -> (i32, i32, i32) {
    %c0_i32 = arith.constant 0 : i32
    %c0_i32_0 = arith.constant 0 : i32
    return %arg0, %c0_i32, %arg1 : i32, i32, i32
  }
}

</mosaic_0001>

<llo_original>
// kernel: context_gating.1
$region0: #{context_gating.1}
  #allocation0 [shape = 'u32[]', space=smem, size = 0x4, offset = 0x4, fixed_abs, tag = 'smem constant byte address 0x4 - core index']
  #allocation1 [shape = 'u32[144,128]{1,0:T(1,128)}', space=vmem, size = 0x12000, scoped, tag = 'internal scratch']
  %s0 = inlined_call_operand.hbm [shape: f32[2,4,256], index: 0, kind: input, shape index: {}]
  %s1 = inlined_call_operand.hbm [shape: f32[4,4], index: 1, kind: input, shape index: {}]
  %s2 = inlined_call_operand.hbm [shape: f32[4,1], index: 2, kind: input, shape index: {}]
  %s3 = inlined_call_operand.hbm [shape: f32[2,4,256], index: 3, kind: output, shape index: {}]
  %s4 = sld [smem:[#allocation0]]
  $region57: #{context_gating.1} parent=0
    _
  %s6 = ssub.s32 1, %s4
  %s7 = scalar_select 0, %s6, %s4
  $region1: #{context_gating.1} parent=0
    #allocation2 [shape = 'u8[8192]{0}', space=vmem, size = 0x2000, scoped, tag = 'input window, operand 0']
    #allocation3 [shape = 's32[2]{0}', space=sflag, size = 0x8, scoped, tag = 'scoped memory for context_gating.1']
    #allocation4 [shape = 's32[2]{0}', space=sflag, size = 0x8, scoped, tag = 'scoped memory for context_gating.1']
    #allocation5 [shape = 'u8[2048]{0}', space=vmem, size = 0x800, scoped, tag = 'input window, operand 1, single buffered']
    #allocation6 [shape = 's32[1]{0}', space=sflag, size = 0x4, scoped, tag = 'scoped memory for context_gating.1']
    #allocation7 [shape = 'u8[2048]{0}', space=vmem, size = 0x800, scoped, tag = 'input window, operand 2, single buffered']
    #allocation8 [shape = 'u8[8192]{0}', space=vmem, size = 0x2000, scoped, tag = 'output window, operand 0']
    %8 = vsyncpa [#allocation3], 0
    %s9 = scalar_lea.sflag [#allocation3], 1
    %10 = vsyncpa %s9, 0
    %11 = vsyncpa [#allocation6], 0
    %12 = vsyncpa [#allocation4], 0
    %s13 = scalar_lea.sflag [#allocation4], 1
    %14 = vsyncpa %s13, 0
    loop: start=0, step=1, limit=4
    $region2: #{context_gating.1} parent=1 // loop_pre_header
      _
    $region3: #{context_gating.1} parent=1 // loop_header
      %s16 = sphi 0, %s20
      %p17 = scmp.ge.s32.totalorder %s16, 4
      %s23 = sphi 0, %s35
      %s24 = sphi 0, %s31
      %s25 = sphi 0, %s23
      %s26 = sphi 0, %s24
      %s27 = sphi 0, %s25
      %s28 = sphi 0, %s26
      %s40 = sphi 0, %s42
      %s43 = sphi 0, %s40
      %s44 = sphi 0, %s43
      %s60 = sphi 0, %s44
      %s64 = sphi 0, %s64
      %s66 = sphi 0, %s64
      %s67 = sphi 0, %s66
      %s81 = sphi 0, %s67
      %s85 = sphi 0, %s85
      %s87 = sphi 0, %s85
      %s88 = sphi 0, %s87
      %s102 = sphi 0, %s88
      %s110 = sphi 0, %s112
      %s113 = sphi 0, %s110
      %s114 = sphi 0, %s113
      %s130 = sphi 0, %s114
    $region4: #{context_gating.1} parent=1 // loop_header_branch
      %19 = sbr.rel (%p17) target = $region8
    $region5: #{context_gating.1} parent=1 // loop_body
      %s21 = ssub.s32 %s16, 1
      %s22 = ssub.s32 %s16, 2
      %s29 = sadd.s32 1, %s24
      %p30 = scmp.ge.s32.totalorder %s29, 1
      %s31 = scalar_select %p30, 0, %s29
      %s32 = sadd.s32 1, %s23
      %s33 = scalar_select %p30, %s32, %s23
      %p34 = scmp.ge.s32.totalorder %s33, 2
      %s35 = scalar_select %p34, 0, %s33
      %s36 = ssub.s32 %s23, %s35
      %s37 = ssub.s32 %s24, %s31
      %s38 = sor.u32 %s36, %s37
      %p39 = scmp.eq.s32.totalorder %s38, 0
      %s41 = sadd.s32 %s40, 1
      %s42 = scalar_select %p39, %s40, %s41
      %p45 = pneg %p39
      %p46 = scmp.eq.s32.totalorder %s16, 1
      %p47 = por %p45, %p46
      %p48 = scmp.ne.s32.totalorder %s40, %s43
      %p49 = scmp.eq.s32.totalorder %s16, 0
      %p50 = por %p48, %p49
      %p51 = scmp.ne.s32.totalorder %s40, %s43
      %p52 = scmp.eq.s32.totalorder %s21, 1
      %p53 = por %p51, %p52
      %p54 = scmp.ne.s32.totalorder %s43, %s44
      %p55 = scmp.eq.s32.totalorder %s21, 0
      %p56 = por %p54, %p55
      %p57 = scmp.ne.s32.totalorder %s43, %s44
      %p58 = scmp.eq.s32.totalorder %s22, 1
      %p59 = por %p57, %p58
      %p61 = scmp.ne.s32.totalorder %s44, %s60
      %p62 = scmp.eq.s32.totalorder %s22, 0
      %p63 = por %p61, %p62
      %s65 = sadd.s32 %s64, 1
      %p68 = scmp.eq.s32.totalorder %s16, 1
      %p69 = scmp.ne.s32.totalorder %s64, %s66
      %p70 = scmp.eq.s32.totalorder %s16, 0
      %p71 = por %p69, %p70
      %p72 = scmp.ne.s32.totalorder %s64, %s66
      %p73 = scmp.eq.s32.totalorder %s21, 1
      %p74 = por %p72, %p73
      %p75 = scmp.ne.s32.totalorder %s66, %s67
      %p76 = scmp.eq.s32.totalorder %s21, 0
      %p77 = por %p75, %p76
      %p78 = scmp.ne.s32.totalorder %s66, %s67
      %p79 = scmp.eq.s32.totalorder %s22, 1
      %p80 = por %p78, %p79
      %p82 = scmp.ne.s32.totalorder %s67, %s81
      %p83 = scmp.eq.s32.totalorder %s22, 0
      %p84 = por %p82, %p83
      %s86 = sadd.s32 %s85, 1
      %p89 = scmp.eq.s32.totalorder %s16, 1
      %p90 = scmp.ne.s32.totalorder %s85, %s87
      %p91 = scmp.eq.s32.totalorder %s16, 0
      %p92 = por %p90, %p91
      %p93 = scmp.ne.s32.totalorder %s85, %s87
      %p94 = scmp.eq.s32.totalorder %s21, 1
      %p95 = por %p93, %p94
      %p96 = scmp.ne.s32.totalorder %s87, %s88
      %p97 = scmp.eq.s32.totalorder %s21, 0
      %p98 = por %p96, %p97
      %p99 = scmp.ne.s32.totalorder %s87, %s88
      %p100 = scmp.eq.s32.totalorder %s22, 1
      %p101 = por %p99, %p100
      %p103 = scmp.ne.s32.totalorder %s88, %s102
      %p104 = scmp.eq.s32.totalorder %s22, 0
      %p105 = por %p103, %p104
      %s106 = ssub.s32 %s23, %s35
      %s107 = ssub.s32 %s24, %s31
      %s108 = sor.u32 %s106, %s107
      %p109 = scmp.eq.s32.totalorder %s108, 0
      %s111 = sadd.s32 %s110, 1
      %s112 = scalar_select %p109, %s110, %s111
      %p115 = pneg %p109
      %p116 = scmp.eq.s32.totalorder %s16, 1
      %p117 = por %p115, %p116
      %p118 = scmp.ne.s32.totalorder %s110, %s113
      %p119 = scmp.eq.s32.totalorder %s16, 0
      %p120 = por %p118, %p119
      %p121 = scmp.ne.s32.totalorder %s110, %s113
      %p122 = scmp.eq.s32.totalorder %s21, 1
      %p123 = por %p121, %p122
      %p124 = scmp.ne.s32.totalorder %s113, %s114
      %p125 = scmp.eq.s32.totalorder %s21, 0
      %p126 = por %p124, %p125
      %p127 = scmp.ne.s32.totalorder %s113, %s114
      %p128 = scmp.eq.s32.totalorder %s22, 1
      %p129 = por %p127, %p128
      %p131 = scmp.ne.s32.totalorder %s114, %s130
      %p132 = scmp.eq.s32.totalorder %s22, 0
      %p133 = por %p131, %p132
      %p134 = scmp.le.s32.totalorder 1, %s16
      %p135 = scmp.lt.s32.totalorder %s16, 3
      %p136 = pnand %p134, %p135
      %p137 = pneg %p136
      // Predicated region
      $region9: #{context_gating.1} parent=5 // pred_check
        _
      $region10: #{context_gating.1} parent=5 // pred_check_branch
        %139 = sbr.rel (%p136) target = $region12
      $region11: #{context_gating.1} parent=5 // pred_region
        %s140 = ssub.s32 %s16, 1
        // Predicated region
        $region13: #{context_gating.1} parent=11 // pred_check
          %p141 = pneg %p77
        $region14: #{context_gating.1} parent=11 // pred_check_branch
          %143 = sbr.rel (%p141) target = $region16
        $region15: #{context_gating.1} parent=11 // pred_region
          %s145 = ssub.s32 64, 64
          %146 = vsyncadd [#allocation6], %s145
          %s148 = sshll.u32 [#allocation5], 4
          %s149 = int_to_ptr.vmem [resolvable:$true] %s148
          %151 = dma.hbm_to_vmem [thread:$0]  %s1, 64, %s149, [#allocation6]
        $region16: #{context_gating.1} parent=11 // pred_fallthru
          _
        // Predicated region
        $region17: #{context_gating.1} parent=11 // pred_check
          %p152 = pneg %p98
        $region18: #{context_gating.1} parent=11 // pred_check_branch
          %154 = sbr.rel (%p152) target = $region20
        $region19: #{context_gating.1} parent=11 // pred_region
          %s156 = ssub.s32 64, 64
          %157 = vsyncadd [#allocation6], %s156
          %s159 = sshll.u32 [#allocation7], 4
          %s160 = int_to_ptr.vmem [resolvable:$true] %s159
          %162 = dma.hbm_to_vmem [thread:$0]  %s2, 64, %s160, [#allocation6]
        $region20: #{context_gating.1} parent=11 // pred_fallthru
          _
      $region12: #{context_gating.1} parent=5 // pred_fallthru
        _
      %p163 = scmp.lt.s32.totalorder %s16, 2
      // Predicated region
      $region21: #{context_gating.1} parent=5 // pred_check
        %p164 = pneg %p163
      $region22: #{context_gating.1} parent=5 // pred_check_branch
        %166 = sbr.rel (%p164) target = $region24
      $region23: #{context_gating.1} parent=5 // pred_region
        // Predicated region
        $region25: #{context_gating.1} parent=23 // pred_check
          %p167 = pneg %p50
        $region26: #{context_gating.1} parent=23 // pred_check_branch
          %169 = sbr.rel (%p167) target = $region28
        $region27: #{context_gating.1} parent=23 // pred_region
          %s170 = sand.u32 %s40, 1
          %s171 = scalar_lea.sflag [#allocation3], %s170
          %s172 = sand.u32 %s40, 1
          %s173 = smul.addr %s172, 8
          %s174 = scalar_lea.vmem [#allocation2], %s173
          %s175 = smul.u32 2, %s24
          %s177 = ssub.s32 128, 128
          %178 = vsyncadd %s171, %s177
          %s179 = smul.addr %s23, 2
          %s180 = sadd.s32 %s175, %s179
          %s181 = smul.addr %s180, 64
          %s182 = scalar_lea.hbm %s0, %s181
          %s184 = sshll.u32 %s174, 4
          %s185 = int_to_ptr.vmem [resolvable:$true] %s184
          %187 = dma.hbm_to_vmem [thread:$0]  %s182, 128, %s185, %s171
        $region28: #{context_gating.1} parent=23 // pred_fallthru
          _
      $region24: #{context_gating.1} parent=5 // pred_fallthru
        _
      %p188 = scmp.le.s32.totalorder 1, %s16
      %p189 = scmp.lt.s32.totalorder %s16, 3
      %p190 = pnand %p188, %p189
      %p191 = pneg %p190
      // Predicated region
      $region29: #{context_gating.1} parent=5 // pred_check
        _
      $region30: #{context_gating.1} parent=5 // pred_check_branch
        %193 = sbr.rel (%p190) target = $region32
      $region31: #{context_gating.1} parent=5 // pred_region
        %s194 = ssub.s32 %s16, 1
        %s195 = sand.u32 %s43, 1
        %s196 = scalar_lea.sflag [#allocation3], %s195
        %s197 = sand.u32 %s43, 1
        %s198 = smul.addr %s197, 8
        %s199 = scalar_lea.vmem [#allocation2], %s198
        // Predicated region
        $region33: #{context_gating.1} parent=31 // pred_check
          %p200 = pneg %p56
        $region34: #{context_gating.1} parent=31 // pred_check_branch
          %202 = sbr.rel (%p200) target = $region36
        $region35: #{context_gating.1} parent=31 // pred_region
          %203 = dma.done %s196, 128
        $region36: #{context_gating.1} parent=31 // pred_fallthru
          _
        // Predicated region
        $region37: #{context_gating.1} parent=31 // pred_check
          %p204 = pneg %p77
        $region38: #{context_gating.1} parent=31 // pred_check_branch
          %206 = sbr.rel (%p204) target = $region40
        $region39: #{context_gating.1} parent=31 // pred_region
          %207 = dma.done [#allocation6], 64
        $region40: #{context_gating.1} parent=31 // pred_fallthru
          _
        // Predicated region
        $region41: #{context_gating.1} parent=31 // pred_check
          %p208 = pneg %p98
        $region42: #{context_gating.1} parent=31 // pred_check_branch
          %210 = sbr.rel (%p208) target = $region44
        $region43: #{context_gating.1} parent=31 // pred_region
          %211 = dma.done [#allocation6], 64
        $region44: #{context_gating.1} parent=31 // pred_fallthru
          _
        %s212 = sand.u32 %s43, 1
        %s213 = scalar_lea.sflag [#allocation3], %s212
        %s214 = sand.u32 %s43, 1
        %s215 = smul.addr %s214, 8
        %s216 = scalar_lea.vmem [#allocation2], %s215
        %p217 = pneg %p56
        %p218 = pneg %p53
        %p219 = pneg %p77
        %p220 = pneg %p74
        %p221 = pneg %p98
        %p222 = pneg %p95
        %p223 = pneg %p126
        %p224 = pneg %p123
        %s225 = sand.u32 %s113, 1
        %s226 = scalar_lea.sflag [#allocation4], %s225
        %s227 = sand.u32 %s113, 1
        %s228 = smul.addr %s227, 8
        %s229 = scalar_lea.vmem [#allocation8], %s228
        %s230 = smul.u32 2, %s26
        %s231 = smul.u32 2, %s26
        %v232 = vld [vmem:[%s199] sm:$0xff]
        %v233 = vld [vmem:[#allocation5] sm:$0xf]
        %v234 = vld [vmem:[#allocation7] sm:$0xf]
        %236 = vset.pattern.permute.xlu0 0
        %237 = vperm.xlu0 %236, %v234
        %v238 = vpop.permute.xlu0 %237
        %v241 = vcombine.high %v232, %v232
        %vm242 = vcmask 31744
        %v244 = vsel %vm242, %v233, 0
        %vm246 = vcmask 1043456
        %v247 = vsel %vm246, %v232, 0
        %v249 = vsel %vm246, %v241, 0
        %251 = vmatprep.subr.mxu0 %v249
        %252 = vmatpush1.msra.mxu0 %v247
        %253 = vmatprep.subr.mxu0 0.0
        %254 = vmatpush1.msra.mxu0 0.0
        %255 = vmatprep.subr.mxu0 0.0
        %256 = vmatpush1.msra.mxu0 0.0
        %257 = vmatprep.subr.mxu0 0.0
        %258 = vmatpush1.msra.mxu0 0.0
        %259 = vmatprep.subr.mxu0 0.0
        %260 = vmatpush1.msra.mxu0 0.0
        %261 = vmatprep.subr.mxu0 0.0
        %262 = vmatpush1.msra.mxu0 0.0
        %263 = vmatprep.subr.mxu0 0.0
        %264 = vmatpush1.msra.mxu0 0.0
        %265 = vmatprep.subr.mxu0 0.0
        %266 = vmatpush1.msra.mxu0 0.0
        %267 = vmatprep.subr.mxu0 0.0
        %268 = vmatpush1.msra.mxu0 0.0
        %269 = vmatprep.subr.mxu0 0.0
        %270 = vmatpush1.msra.mxu0 0.0
        %271 = vmatprep.subr.mxu0 0.0
        %272 = vmatpush1.msra.mxu0 0.0
        %273 = vmatprep.subr.mxu0 0.0
        %274 = vmatpush1.msra.mxu0 0.0
        %275 = vmatprep.subr.mxu0 0.0
        %276 = vmatpush1.msra.mxu0 0.0
        %277 = vmatprep.subr.mxu0 0.0
        %278 = vmatpush1.msra.mxu0 0.0
        %279 = vmatprep.subr.mxu0 0.0
        %280 = vmatpush1.msra.mxu0 0.0
        %281 = vmatprep.subr.mxu0 0.0
        %282 = vmatpush1.msra.mxu0 0.0
        %283 = vmatprep.subr.mxu0 0.0
        %284 = vmatpush1.msra.mxu0 0.0
        %285 = vmatprep.subr.mxu0 0.0
        %286 = vmatpush1.msra.mxu0 0.0
        %287 = vmatprep.subr.mxu0 0.0
        %288 = vmatpush1.msra.mxu0 0.0
        %289 = vmatprep.subr.mxu0 0.0
        %290 = vmatpush1.msra.mxu0 0.0
        %291 = vmatprep.subr.mxu0 0.0
        %292 = vmatpush1.msra.mxu0 0.0
        %293 = vmatprep.subr.mxu0 0.0
        %294 = vmatpush1.msra.mxu0 0.0
        %295 = vmatprep.subr.mxu0 0.0
        %296 = vmatpush1.msra.mxu0 0.0
        %297 = vmatprep.subr.mxu0 0.0
        %298 = vmatpush1.msra.mxu0 0.0
        %299 = vmatprep.subr.mxu0 0.0
        %300 = vmatpush1.msra.mxu0 0.0
        %301 = vmatprep.subr.mxu0 0.0
        %302 = vmatpush1.msra.mxu0 0.0
        %303 = vmatprep.subr.mxu0 0.0
        %304 = vmatpush1.msra.mxu0 0.0
        %305 = vmatprep.subr.mxu0 0.0
        %306 = vmatpush1.msra.mxu0 0.0
        %307 = vmatprep.subr.mxu0 0.0
        %308 = vmatpush1.msra.mxu0 0.0
        %309 = vmatprep.subr.mxu0 0.0
        %310 = vmatpush1.msra.mxu0 0.0
        %311 = vmatprep.subr.mxu0 0.0
        %312 = vmatpush1.msra.mxu0 0.0
        %313 = vmatprep.subr.mxu0 0.0
        %314 = vmatpush1.msra.mxu0 0.0
        %315 = vmatprep.mubr.f32.mxu0 0.0
        %316 = vmatmul.mubr.f32.gmra.mrb[0].mxu0 %v244
        %v317 = vpop.f32.mrb[0].mxu0
        %v318 = vadd.f32 %v238, %v317
        %v319 = vpop.f32.mrb[0].mxu0
        %v320 = vadd.f32 %v238, %v319
        %321 = vdwg.mxu0
        %v322 = vmul.f32 %v318, 0.5
        %v323 = vmul.f32 %v320, 0.5
        %v324 = vtanh.pop %v322
        %v325 = vtanh.pop %v323
        %v326 = vadd.f32 %v324, 1.0
        %v327 = vadd.f32 %v325, 1.0
        %v328 = vmul.f32 %v326, 0.5
        %v329 = vmul.f32 %v327, 0.5
        %v332 = vcombine.low %v328, %v329
        %v334 = vmul.f32 %v232, %v332
        %335 = vst [vmem:[%s229] sm:$0xff] %v334
        %s336 = sand.u32 %s113, 1
        %s337 = scalar_lea.sflag [#allocation4], %s336
        %s338 = sand.u32 %s113, 1
        %s339 = smul.addr %s338, 8
        %s340 = scalar_lea.vmem [#allocation8], %s339
        // Predicated region
        $region45: #{context_gating.1} parent=31 // pred_check
          %p341 = pneg %p123
        $region46: #{context_gating.1} parent=31 // pred_check_branch
          %343 = sbr.rel (%p341) target = $region48
        $region47: #{context_gating.1} parent=31 // pred_region
          %s344 = smul.u32 2, %s26
          %s346 = ssub.s32 128, 128
          %347 = vsyncadd %s337, %s346
          %s348 = smul.addr %s25, 2
          %s349 = sadd.s32 %s344, %s348
          %s350 = smul.addr %s349, 64
          %s351 = scalar_lea.hbm %s3, %s350
          %s353 = sshll.u32 %s340, 4
          %s354 = int_to_ptr.vmem [resolvable:$true] %s353
          %356 = dma.vmem_to_hbm [thread:$0]  %s354, 128, %s351, %s337
        $region48: #{context_gating.1} parent=31 // pred_fallthru
          _
      $region32: #{context_gating.1} parent=5 // pred_fallthru
        _
      %p357 = scmp.le.s32.totalorder 2, %s16
      // Predicated region
      $region49: #{context_gating.1} parent=5 // pred_check
        %p358 = pneg %p357
      $region50: #{context_gating.1} parent=5 // pred_check_branch
        %360 = sbr.rel (%p358) target = $region52
      $region51: #{context_gating.1} parent=5 // pred_region
        %s361 = ssub.s32 %s16, 2
        // Predicated region
        $region53: #{context_gating.1} parent=51 // pred_check
          %p362 = pneg %p129
        $region54: #{context_gating.1} parent=51 // pred_check_branch
          %364 = sbr.rel (%p362) target = $region56
        $region55: #{context_gating.1} parent=51 // pred_region
          %s365 = sand.u32 %s114, 1
          %s366 = scalar_lea.sflag [#allocation4], %s365
          %s367 = sand.u32 %s114, 1
          %s368 = smul.addr %s367, 8
          %s369 = scalar_lea.vmem [#allocation8], %s368
          %370 = dma.done %s366, 128
        $region56: #{context_gating.1} parent=51 // pred_fallthru
          _
      $region52: #{context_gating.1} parent=5 // pred_fallthru
        _
    $region6: #{context_gating.1} parent=1 // loop_footer
      %s20 = sadd.s32 1, %s16
    $region7: #{context_gating.1} parent=1 // loop_footer_branch
      %15 = sbr.rel target = $region3
    $region8: #{context_gating.1} parent=1 // loop_exit
      _
    %371 = vsyncpa [#allocation3], 1
    %s372 = scalar_lea.sflag [#allocation3], 1
    %373 = vsyncpa %s372, 1
    %374 = vsyncpa [#allocation6], 1
    %375 = vsyncpa [#allocation4], 1
    %s376 = scalar_lea.sflag [#allocation4], 1
    %377 = vsyncpa %s376, 1

</llo_original>
